<compile_context>
chip_gen: v7x
topology: tpu7x:2x2x1
jax: 0.10.0
libtpu: 0.0.40
codegen_flags: <defaults>
</compile_context>

<pallas_src>
import functools

import jax
import jax.numpy as jnp
from jax import lax
from jax.experimental import pallas as pl
from jax.experimental.pallas import tpu as pltpu

_LANES = 128


def _lane_fold(a):
    """Sum an (R, C) array over lane-groups of 128 -> (R, 128); C % 128 == 0.

    Tile-aligned static slices + vreg adds only (VPU); no cross-lane (XLU)
    work.  The single cross-lane reduce is deferred to the finalize step.
    """
    c = a.shape[1]
    acc = a[:, :_LANES]
    for j in range(1, c // _LANES):
        acc = acc + a[:, j * _LANES:(j + 1) * _LANES]
    return acc


def _accumulate(x, p, s1_acc, s2_acc, sxp_acc, sp_acc):
    """Fold one (TILE_B, TILE_F) f32 tile into the lane-wise accumulators.

    x and p must already be zero in any out-of-bounds column.  s1/s2 use the
    raw x (NaNs propagate into mean/std, as in torch); sxp/sp use NaN-cleaned
    values (torch zeroes NaNs before the weighted sum).
    """
    xc = jnp.where(jnp.isnan(x), 0.0, x)
    pc = jnp.where(jnp.isnan(p), 0.0, p)
    s1_acc[...] += _lane_fold(x)
    s2_acc[...] += _lane_fold(x * x)
    sxp_acc[...] += _lane_fold(xc * pc)
    sp_acc[...] += _lane_fold(pc)


def _pal_loss_kernel(x_ref, p_ref, o_ref,
                     s1_acc, s2_acc, sxp_acc, sp_acc,
                     *, f_total, last_tile_cols, tile_f, eps):
    # x_ref / p_ref: (TILE_B, TILE_F) input tiles;  o_ref: (TILE_B, 1) loss.
    k = pl.program_id(1)
    n_k = pl.num_programs(1)

    @pl.when(k == 0)
    def _init():
        s1_acc[...] = jnp.zeros_like(s1_acc)
        s2_acc[...] = jnp.zeros_like(s2_acc)
        sxp_acc[...] = jnp.zeros_like(sxp_acc)
        sp_acc[...] = jnp.zeros_like(sp_acc)

    # Per-tile upcast in VMEM; inputs stream from HBM in their own dtype.
    x = x_ref[...].astype(jnp.float32)
    p = p_ref[...].astype(jnp.float32)

    if last_tile_cols == tile_f:
        # F is a multiple of TILE_F: every tile is full width, never mask.
        _accumulate(x, p, s1_acc, s2_acc, sxp_acc, sp_acc)
    else:
        # Only the final F tile carries out-of-bounds columns; the mask work
        # (iota + compare + selects) is paid on that single tile only.
        @pl.when(k < n_k - 1)
        def _full_tile():
            _accumulate(x, p, s1_acc, s2_acc, sxp_acc, sp_acc)

        @pl.when(k == n_k - 1)
        def _ragged_tile():
            col = lax.broadcasted_iota(jnp.int32, x.shape, 1)
            valid = col < last_tile_cols
            xm = jnp.where(valid, x, 0.0)
            pm = jnp.where(valid, p, 0.0)
            _accumulate(xm, pm, s1_acc, s2_acc, sxp_acc, sp_acc)

    @pl.when(k == n_k - 1)
    def _finalize():
        # Single cross-lane reduce per accumulator, once per row block.
        s1 = jnp.sum(s1_acc[...], axis=1, keepdims=True)
        s2 = jnp.sum(s2_acc[...], axis=1, keepdims=True)
        sxp = jnp.sum(sxp_acc[...], axis=1, keepdims=True)
        sp = jnp.sum(sp_acc[...], axis=1, keepdims=True)

        n = jnp.float32(f_total)
        mean = s1 / n
        ddof = jnp.float32(f_total - 1 if f_total > 1 else 1)  # avoid /0 at F==1
        var = jnp.maximum((s2 - n * mean * mean) / ddof, 0.0)  # max keeps NaN
        std = jnp.sqrt(var) + eps
        mean = jnp.where(jnp.isnan(mean), 0.0, mean)
        std = jnp.where(jnp.isnan(std), 0.0, std)
        # Factored loss: -sum((x - mean)/std * p) = -(sum(x*p) - mean*sum(p))/std
        o_ref[...] = -(sxp - mean * sp) / std


def _round_up(v, m):
    return ((v + m - 1) // m) * m


def _select_tiles(B, F, itemsize):
    """Pick (TILE_B, TILE_F).

    TILE_B: big enough to amortize the ~0.35us per-grid-step overhead, but
    capped so the 'parallel' B axis keeps >= 2 blocks whenever B allows it
    (v7x two-TensorCore sharding).
    TILE_F: multiple of 128 lanes, sized to a ~2 MiB-per-input byte budget and
    capped at 8192 lanes so the double-buffered working set stays well inside
    v7x's 64 MiB VMEM (and the in-kernel lane fold stays short).
    """
    tile_b = min(128, max(8, _round_up((B + 1) // 2, 8)))
    tile_b = min(tile_b, _round_up(B, 8))
    target_bytes = 2 << 20
    tile_f = target_bytes // max(1, tile_b * itemsize)
    tile_f = max(_LANES, min(8192, (tile_f // _LANES) * _LANES))
    tile_f = min(tile_f, _round_up(F, _LANES))
    return tile_b, tile_f


def privileged_attribution_loss(attribution_maps, prior_maps):
    """attribution_maps, prior_maps: (B, C, H, W) float arrays -> scalar f32."""
    eps = 1e-8
    B = attribution_maps.shape[0]
    # Flatten only (free for contiguous layouts) and keep the input dtype —
    # bf16/fp16 callers stream half the HBM bytes; the f32 cast is per-tile.
    x = attribution_maps.reshape(B, -1)
    p = prior_maps.reshape(B, -1)
    F = x.shape[1]

    itemsize = max(x.dtype.itemsize, p.dtype.itemsize)
    TILE_B, TILE_F = _select_tiles(B, F, itemsize)
    nb = (B + TILE_B - 1) // TILE_B
    nk = (F + TILE_F - 1) // TILE_F
    last_tile_cols = F - (nk - 1) * TILE_F

    kernel = functools.partial(
        _pal_loss_kernel,
        f_total=F, last_tile_cols=last_tile_cols, tile_f=TILE_F, eps=eps)

    # 2 inputs x 2 pipeline buffers per input, plus scratch/output headroom.
    tile_bytes = TILE_B * TILE_F * (x.dtype.itemsize + p.dtype.itemsize)
    vmem_limit = int(min(max(2 * tile_bytes + (4 << 20), 16 << 20), 40 << 20))

    per_row = pl.pallas_call(
        kernel,
        grid=(nb, nk),
        in_specs=[
            pl.BlockSpec((TILE_B, TILE_F), lambda b, k: (b, k)),
            pl.BlockSpec((TILE_B, TILE_F), lambda b, k: (b, k)),
        ],
        out_specs=pl.BlockSpec((TILE_B, 1), lambda b, k: (b, 0)),
        out_shape=jax.ShapeDtypeStruct((B, 1), jnp.float32),
        scratch_shapes=[pltpu.VMEM((TILE_B, _LANES), jnp.float32)
                        for _ in range(4)],
        compiler_params=pltpu.CompilerParams(
            dimension_semantics=("parallel", "arbitrary"),
            vmem_limit_bytes=vmem_limit),
    )(x, p)

    # Batch mean over the per-row losses (no padded rows exist anymore).
    return jnp.mean(per_row)


def _reference(attribution_maps, prior_maps):
    B = attribution_maps.shape[0]
    x = attribution_maps.reshape(B, -1).astype(jnp.float32)
    p = prior_maps.reshape(B, -1).astype(jnp.float32)
    mean = jnp.mean(x, axis=1, keepdims=True)
    std = jnp.std(x, axis=1, keepdims=True, ddof=1) + 1e-8
    x = jnp.where(jnp.isnan(x), 0.0, x)
    mean = jnp.where(jnp.isnan(mean), 0.0, mean)
    std = jnp.where(jnp.isnan(std), 0.0, std)
    p = jnp.where(jnp.isnan(p), 0.0, p)
    return jnp.mean(-jnp.sum((x - mean) / std * p, axis=1))


if __name__ == "__main__":
    key = jax.random.PRNGKey(0)
    k1, k2, k3, k4, k5, k6, k7, k8 = jax.random.split(key, 8)

    # Case 1: intended-use shape, F 128-aligned (pure fast path).
    a1 = jax.random.normal(k1, (2, 4, 16, 16), dtype=jnp.float32)
    p1 = jax.random.uniform(k2, (2, 4, 16, 16), dtype=jnp.float32)
    l1 = privileged_attribution_loss(a1, p1)
    jax.block_until_ready(l1)
    r1 = _reference(a1, p1)
    assert jnp.allclose(l1, r1, rtol=1e-4, atol=1e-4), (l1, r1)

    # Case 2: B and F both unaligned (ragged single block, masked path).
    a2 = jax.random.normal(k3, (3, 3, 20, 20), dtype=jnp.float32)
    p2 = jax.random.uniform(k4, (3, 3, 20, 20), dtype=jnp.float32)
    l2 = privileged_attribution_loss(a2, p2)
    jax.block_until_ready(l2)
    r2 = _reference(a2, p2)
    assert jnp.allclose(l2, r2, rtol=1e-4, atol=1e-4), (l2, r2)

    # Case 3: multiple F tiles with a ragged last tile (fast + masked paths).
    a3 = jax.random.normal(k5, (4, 4, 48, 48), dtype=jnp.float32)
    p3 = jax.random.uniform(k6, (4, 4, 48, 48), dtype=jnp.float32)
    l3 = privileged_attribution_loss(a3, p3)
    jax.block_until_ready(l3)
    r3 = _reference(a3, p3)
    assert jnp.allclose(l3, r3, rtol=1e-3, atol=1e-3), (l3, r3)

    # Case 4: multiple (ragged) B blocks + bf16 inputs (per-tile upcast path).
    a4 = jax.random.normal(k7, (20, 3, 16, 16), dtype=jnp.bfloat16)
    p4 = jax.random.uniform(k8, (20, 3, 16, 16), dtype=jnp.bfloat16)
    l4 = privileged_attribution_loss(a4, p4)
    jax.block_until_ready(l4)
    r4 = _reference(a4, p4)
    assert jnp.allclose(l4, r4, rtol=1e-3, atol=1e-3), (l4, r4)

    print("KERNEL_OK")
</pallas_src>

<mosaic_0001>
module attributes {stable_mosaic.version = 11 : i64} {
  func.func @_pal_loss_kernel(%arg0: i32, %arg1: i32, %arg2: memref<8x1024xf32, #tpu.memory_space<vmem>>, %arg3: memref<8x1024xf32, #tpu.memory_space<vmem>>, %arg4: memref<8x1xf32, #tpu.memory_space<vmem>>, %arg5: memref<8x128xf32, #tpu.memory_space<vmem>>, %arg6: memref<8x128xf32, #tpu.memory_space<vmem>>, %arg7: memref<8x128xf32, #tpu.memory_space<vmem>>, %arg8: memref<8x128xf32, #tpu.memory_space<vmem>>) attributes {dimension_semantics = [#tpu.dimension_semantics<parallel>, #tpu.dimension_semantics<arbitrary>], iteration_bounds = array<i64: 1, 1>, scalar_prefetch = 0 : i64, scratch_operands = 4 : i64, tpu.core_type = #tpu.core_type<tc>, window_params = [{transform_indices = @transform_0, window_bounds = array<i64: 8, 1024>}, {transform_indices = @transform_1, window_bounds = array<i64: 8, 1024>}, {transform_indices = @transform_2, window_bounds = array<i64: 8, 1>}]} {
    %c0_i32 = arith.constant 0 : i32
    %0 = arith.cmpi eq, %arg1, %c0_i32 : i32
    %1 = arith.extui %0 : i1 to i32
    %c0_i32_0 = arith.constant 0 : i32
    %2 = arith.cmpi ne, %1, %c0_i32_0 : i32
    scf.if %2 {
      %cst_23 = arith.constant 0.000000e+00 : f32
      %88 = vector.broadcast %cst_23 : f32 to vector<8x128xf32>
      %c0_24 = arith.constant 0 : index
      %c0_25 = arith.constant 0 : index
      %89 = vector.load %arg5[%c0_24, %c0_25] : memref<8x128xf32, #tpu.memory_space<vmem>>, vector<8x128xf32>
      tpu.vector_store %arg5[%c0_24, %c0_25], %88 {strides = array<i32>} : memref<8x128xf32, #tpu.memory_space<vmem>>, vector<8x128xf32>,
      %cst_26 = arith.constant 0.000000e+00 : f32
      %90 = vector.broadcast %cst_26 : f32 to vector<8x128xf32>
      %c0_27 = arith.constant 0 : index
      %c0_28 = arith.constant 0 : index
      %91 = vector.load %arg6[%c0_27, %c0_28] : memref<8x128xf32, #tpu.memory_space<vmem>>, vector<8x128xf32>
      tpu.vector_store %arg6[%c0_27, %c0_28], %90 {strides = array<i32>} : memref<8x128xf32, #tpu.memory_space<vmem>>, vector<8x128xf32>,
      %cst_29 = arith.constant 0.000000e+00 : f32
      %92 = vector.broadcast %cst_29 : f32 to vector<8x128xf32>
      %c0_30 = arith.constant 0 : index
      %c0_31 = arith.constant 0 : index
      %93 = vector.load %arg7[%c0_30, %c0_31] : memref<8x128xf32, #tpu.memory_space<vmem>>, vector<8x128xf32>
      tpu.vector_store %arg7[%c0_30, %c0_31], %92 {strides = array<i32>} : memref<8x128xf32, #tpu.memory_space<vmem>>, vector<8x128xf32>,
      %cst_32 = arith.constant 0.000000e+00 : f32
      %94 = vector.broadcast %cst_32 : f32 to vector<8x128xf32>
      %c0_33 = arith.constant 0 : index
      %c0_34 = arith.constant 0 : index
      %95 = vector.load %arg8[%c0_33, %c0_34] : memref<8x128xf32, #tpu.memory_space<vmem>>, vector<8x128xf32>
      tpu.vector_store %arg8[%c0_33, %c0_34], %94 {strides = array<i32>} : memref<8x128xf32, #tpu.memory_space<vmem>>, vector<8x128xf32>,
    } else {
    }
    %c0 = arith.constant 0 : index
    %c0_1 = arith.constant 0 : index
    %3 = vector.load %arg2[%c0, %c0_1] : memref<8x1024xf32, #tpu.memory_space<vmem>>, vector<8x1024xf32>
    %c0_2 = arith.constant 0 : index
    %c0_3 = arith.constant 0 : index
    %4 = vector.load %arg3[%c0_2, %c0_3] : memref<8x1024xf32, #tpu.memory_space<vmem>>, vector<8x1024xf32>
    %5 = arith.cmpf one, %3, %3 : vector<8x1024xf32>
    %cst = arith.constant 0.000000e+00 : f32
    %6 = vector.broadcast %cst : f32 to vector<8x1024xf32>
    %7 = arith.select %5, %6, %3 : vector<8x1024xi1>, vector<8x1024xf32>
    %8 = arith.cmpf one, %4, %4 : vector<8x1024xf32>
    %cst_4 = arith.constant 0.000000e+00 : f32
    %9 = vector.broadcast %cst_4 : f32 to vector<8x1024xf32>
    %10 = arith.select %8, %9, %4 : vector<8x1024xi1>, vector<8x1024xf32>
    %c0_5 = arith.constant 0 : index
    %c0_6 = arith.constant 0 : index
    %11 = vector.load %arg5[%c0_5, %c0_6] : memref<8x128xf32, #tpu.memory_space<vmem>>, vector<8x128xf32>
    %12 = vector.extract_strided_slice %3 {offsets = [0, 0], sizes = [8, 128], strides = [1, 1]} : vector<8x1024xf32> to vector<8x128xf32>
    %13 = vector.extract_strided_slice %3 {offsets = [0, 128], sizes = [8, 128], strides = [1, 1]} : vector<8x1024xf32> to vector<8x128xf32>
    %14 = arith.addf %12, %13 : vector<8x128xf32>
    %15 = vector.extract_strided_slice %3 {offsets = [0, 256], sizes = [8, 128], strides = [1, 1]} : vector<8x1024xf32> to vector<8x128xf32>
    %16 = arith.addf %14, %15 : vector<8x128xf32>
    %17 = vector.extract_strided_slice %3 {offsets = [0, 384], sizes = [8, 128], strides = [1, 1]} : vector<8x1024xf32> to vector<8x128xf32>
    %18 = arith.addf %16, %17 : vector<8x128xf32>
    %19 = vector.extract_strided_slice %3 {offsets = [0, 512], sizes = [8, 128], strides = [1, 1]} : vector<8x1024xf32> to vector<8x128xf32>
    %20 = arith.addf %18, %19 : vector<8x128xf32>
    %21 = vector.extract_strided_slice %3 {offsets = [0, 640], sizes = [8, 128], strides = [1, 1]} : vector<8x1024xf32> to vector<8x128xf32>
    %22 = arith.addf %20, %21 : vector<8x128xf32>
    %23 = vector.extract_strided_slice %3 {offsets = [0, 768], sizes = [8, 128], strides = [1, 1]} : vector<8x1024xf32> to vector<8x128xf32>
    %24 = arith.addf %22, %23 : vector<8x128xf32>
    %25 = vector.extract_strided_slice %3 {offsets = [0, 896], sizes = [8, 128], strides = [1, 1]} : vector<8x1024xf32> to vector<8x128xf32>
    %26 = arith.addf %24, %25 : vector<8x128xf32>
    %27 = arith.addf %11, %26 : vector<8x128xf32>
    %c0_7 = arith.constant 0 : index
    %c0_8 = arith.constant 0 : index
    %28 = vector.load %arg5[%c0_7, %c0_8] : memref<8x128xf32, #tpu.memory_space<vmem>>, vector<8x128xf32>
    tpu.vector_store %arg5[%c0_7, %c0_8], %27 {strides = array<i32>} : memref<8x128xf32, #tpu.memory_space<vmem>>, vector<8x128xf32>,
    %c0_9 = arith.constant 0 : index
    %c0_10 = arith.constant 0 : index
    %29 = vector.load %arg6[%c0_9, %c0_10] : memref<8x128xf32, #tpu.memory_space<vmem>>, vector<8x128xf32>
    %30 = arith.mulf %3, %3 : vector<8x1024xf32>
    %31 = vector.extract_strided_slice %30 {offsets = [0, 0], sizes = [8, 128], strides = [1, 1]} : vector<8x1024xf32> to vector<8x128xf32>
    %32 = vector.extract_strided_slice %30 {offsets = [0, 128], sizes = [8, 128], strides = [1, 1]} : vector<8x1024xf32> to vector<8x128xf32>
    %33 = arith.addf %31, %32 : vector<8x128xf32>
    %34 = vector.extract_strided_slice %30 {offsets = [0, 256], sizes = [8, 128], strides = [1, 1]} : vector<8x1024xf32> to vector<8x128xf32>
    %35 = arith.addf %33, %34 : vector<8x128xf32>
    %36 = vector.extract_strided_slice %30 {offsets = [0, 384], sizes = [8, 128], strides = [1, 1]} : vector<8x1024xf32> to vector<8x128xf32>
    %37 = arith.addf %35, %36 : vector<8x128xf32>
    %38 = vector.extract_strided_slice %30 {offsets = [0, 512], sizes = [8, 128], strides = [1, 1]} : vector<8x1024xf32> to vector<8x128xf32>
    %39 = arith.addf %37, %38 : vector<8x128xf32>
    %40 = vector.extract_strided_slice %30 {offsets = [0, 640], sizes = [8, 128], strides = [1, 1]} : vector<8x1024xf32> to vector<8x128xf32>
    %41 = arith.addf %39, %40 : vector<8x128xf32>
    %42 = vector.extract_strided_slice %30 {offsets = [0, 768], sizes = [8, 128], strides = [1, 1]} : vector<8x1024xf32> to vector<8x128xf32>
    %43 = arith.addf %41, %42 : vector<8x128xf32>
    %44 = vector.extract_strided_slice %30 {offsets = [0, 896], sizes = [8, 128], strides = [1, 1]} : vector<8x1024xf32> to vector<8x128xf32>
    %45 = arith.addf %43, %44 : vector<8x128xf32>
    %46 = arith.addf %29, %45 : vector<8x128xf32>
    %c0_11 = arith.constant 0 : index
    %c0_12 = arith.constant 0 : index
    %47 = vector.load %arg6[%c0_11, %c0_12] : memref<8x128xf32, #tpu.memory_space<vmem>>, vector<8x128xf32>
    tpu.vector_store %arg6[%c0_11, %c0_12], %46 {strides = array<i32>} : memref<8x128xf32, #tpu.memory_space<vmem>>, vector<8x128xf32>,
    %c0_13 = arith.constant 0 : index
    %c0_14 = arith.constant 0 : index
    %48 = vector.load %arg7[%c0_13, %c0_14] : memref<8x128xf32, #tpu.memory_space<vmem>>, vector<8x128xf32>
    %49 = arith.mulf %7, %10 : vector<8x1024xf32>
    %50 = vector.extract_strided_slice %49 {offsets = [0, 0], sizes = [8, 128], strides = [1, 1]} : vector<8x1024xf32> to vector<8x128xf32>
    %51 = vector.extract_strided_slice %49 {offsets = [0, 128], sizes = [8, 128], strides = [1, 1]} : vector<8x1024xf32> to vector<8x128xf32>
    %52 = arith.addf %50, %51 : vector<8x128xf32>
    %53 = vector.extract_strided_slice %49 {offsets = [0, 256], sizes = [8, 128], strides = [1, 1]} : vector<8x1024xf32> to vector<8x128xf32>
    %54 = arith.addf %52, %53 : vector<8x128xf32>
    %55 = vector.extract_strided_slice %49 {offsets = [0, 384], sizes = [8, 128], strides = [1, 1]} : vector<8x1024xf32> to vector<8x128xf32>
    %56 = arith.addf %54, %55 : vector<8x128xf32>
    %57 = vector.extract_strided_slice %49 {offsets = [0, 512], sizes = [8, 128], strides = [1, 1]} : vector<8x1024xf32> to vector<8x128xf32>
    %58 = arith.addf %56, %57 : vector<8x128xf32>
    %59 = vector.extract_strided_slice %49 {offsets = [0, 640], sizes = [8, 128], strides = [1, 1]} : vector<8x1024xf32> to vector<8x128xf32>
    %60 = arith.addf %58, %59 : vector<8x128xf32>
    %61 = vector.extract_strided_slice %49 {offsets = [0, 768], sizes = [8, 128], strides = [1, 1]} : vector<8x1024xf32> to vector<8x128xf32>
    %62 = arith.addf %60, %61 : vector<8x128xf32>
    %63 = vector.extract_strided_slice %49 {offsets = [0, 896], sizes = [8, 128], strides = [1, 1]} : vector<8x1024xf32> to vector<8x128xf32>
    %64 = arith.addf %62, %63 : vector<8x128xf32>
    %65 = arith.addf %48, %64 : vector<8x128xf32>
    %c0_15 = arith.constant 0 : index
    %c0_16 = arith.constant 0 : index
    %66 = vector.load %arg7[%c0_15, %c0_16] : memref<8x128xf32, #tpu.memory_space<vmem>>, vector<8x128xf32>
    tpu.vector_store %arg7[%c0_15, %c0_16], %65 {strides = array<i32>} : memref<8x128xf32, #tpu.memory_space<vmem>>, vector<8x128xf32>,
    %c0_17 = arith.constant 0 : index
    %c0_18 = arith.constant 0 : index
    %67 = vector.load %arg8[%c0_17, %c0_18] : memref<8x128xf32, #tpu.memory_space<vmem>>, vector<8x128xf32>
    %68 = vector.extract_strided_slice %10 {offsets = [0, 0], sizes = [8, 128], strides = [1, 1]} : vector<8x1024xf32> to vector<8x128xf32>
    %69 = vector.extract_strided_slice %10 {offsets = [0, 128], sizes = [8, 128], strides = [1, 1]} : vector<8x1024xf32> to vector<8x128xf32>
    %70 = arith.addf %68, %69 : vector<8x128xf32>
    %71 = vector.extract_strided_slice %10 {offsets = [0, 256], sizes = [8, 128], strides = [1, 1]} : vector<8x1024xf32> to vector<8x128xf32>
    %72 = arith.addf %70, %71 : vector<8x128xf32>
    %73 = vector.extract_strided_slice %10 {offsets = [0, 384], sizes = [8, 128], strides = [1, 1]} : vector<8x1024xf32> to vector<8x128xf32>
    %74 = arith.addf %72, %73 : vector<8x128xf32>
    %75 = vector.extract_strided_slice %10 {offsets = [0, 512], sizes = [8, 128], strides = [1, 1]} : vector<8x1024xf32> to vector<8x128xf32>
    %76 = arith.addf %74, %75 : vector<8x128xf32>
    %77 = vector.extract_strided_slice %10 {offsets = [0, 640], sizes = [8, 128], strides = [1, 1]} : vector<8x1024xf32> to vector<8x128xf32>
    %78 = arith.addf %76, %77 : vector<8x128xf32>
    %79 = vector.extract_strided_slice %10 {offsets = [0, 768], sizes = [8, 128], strides = [1, 1]} : vector<8x1024xf32> to vector<8x128xf32>
    %80 = arith.addf %78, %79 : vector<8x128xf32>
    %81 = vector.extract_strided_slice %10 {offsets = [0, 896], sizes = [8, 128], strides = [1, 1]} : vector<8x1024xf32> to vector<8x128xf32>
    %82 = arith.addf %80, %81 : vector<8x128xf32>
    %83 = arith.addf %67, %82 : vector<8x128xf32>
    %c0_19 = arith.constant 0 : index
    %c0_20 = arith.constant 0 : index
    %84 = vector.load %arg8[%c0_19, %c0_20] : memref<8x128xf32, #tpu.memory_space<vmem>>, vector<8x128xf32>
    tpu.vector_store %arg8[%c0_19, %c0_20], %83 {strides = array<i32>} : memref<8x128xf32, #tpu.memory_space<vmem>>, vector<8x128xf32>,
    %c0_i32_21 = arith.constant 0 : i32
    %85 = arith.cmpi eq, %arg1, %c0_i32_21 : i32
    %86 = arith.extui %85 : i1 to i32
    %c0_i32_22 = arith.constant 0 : i32
    %87 = arith.cmpi ne, %86, %c0_i32_22 : i32
    scf.if %87 {
      %c0_23 = arith.constant 0 : index
      %c0_24 = arith.constant 0 : index
      %88 = vector.load %arg5[%c0_23, %c0_24] : memref<8x128xf32, #tpu.memory_space<vmem>>, vector<8x128xf32>
      %cst_25 = arith.constant dense<0.000000e+00> : vector<8xf32>
      %89 = vector.multi_reduction <add>, %88, %cst_25 [1] : vector<8x128xf32> to vector<8xf32>
      %90 = vector.shape_cast %89 : vector<8xf32> to vector<8x1xf32>
      %c0_26 = arith.constant 0 : index
      %c0_27 = arith.constant 0 : index
      %91 = vector.load %arg6[%c0_26, %c0_27] : memref<8x128xf32, #tpu.memory_space<vmem>>, vector<8x128xf32>
      %cst_28 = arith.constant dense<0.000000e+00> : vector<8xf32>
      %92 = vector.multi_reduction <add>, %91, %cst_28 [1] : vector<8x128xf32> to vector<8xf32>
      %93 = vector.shape_cast %92 : vector<8xf32> to vector<8x1xf32>
      %c0_29 = arith.constant 0 : index
      %c0_30 = arith.constant 0 : index
      %94 = vector.load %arg7[%c0_29, %c0_30] : memref<8x128xf32, #tpu.memory_space<vmem>>, vector<8x128xf32>
      %cst_31 = arith.constant dense<0.000000e+00> : vector<8xf32>
      %95 = vector.multi_reduction <add>, %94, %cst_31 [1] : vector<8x128xf32> to vector<8xf32>
      %96 = vector.shape_cast %95 : vector<8xf32> to vector<8x1xf32>
      %c0_32 = arith.constant 0 : index
      %c0_33 = arith.constant 0 : index
      %97 = vector.load %arg8[%c0_32, %c0_33] : memref<8x128xf32, #tpu.memory_space<vmem>>, vector<8x128xf32>
      %cst_34 = arith.constant dense<0.000000e+00> : vector<8xf32>
      %98 = vector.multi_reduction <add>, %97, %cst_34 [1] : vector<8x128xf32> to vector<8xf32>
      %99 = vector.shape_cast %98 : vector<8xf32> to vector<8x1xf32>
      %cst_35 = arith.constant 1.024000e+03 : f32
      %100 = vector.broadcast %cst_35 : f32 to vector<8x1xf32>
      %101 = arith.divf %90, %100 : vector<8x1xf32>
      %cst_36 = arith.constant 1.024000e+03 : f32
      %102 = vector.broadcast %cst_36 : f32 to vector<8x1xf32>
      %103 = arith.mulf %102, %101 : vector<8x1xf32>
      %104 = arith.mulf %103, %101 : vector<8x1xf32>
      %105 = arith.subf %93, %104 : vector<8x1xf32>
      %cst_37 = arith.constant 1.023000e+03 : f32
      %106 = vector.broadcast %cst_37 : f32 to vector<8x1xf32>
      %107 = arith.divf %105, %106 : vector<8x1xf32>
      %cst_38 = arith.constant 0.000000e+00 : f32
      %108 = vector.broadcast %cst_38 : f32 to vector<8x1xf32>
      %109 = arith.maximumf %107, %108 : vector<8x1xf32>
      %110 = math.sqrt %109 : vector<8x1xf32>
      %cst_39 = arith.constant 9.99999993E-9 : f32
      %111 = vector.broadcast %cst_39 : f32 to vector<8x1xf32>
      %112 = arith.addf %110, %111 : vector<8x1xf32>
      %113 = arith.cmpf one, %101, %101 : vector<8x1xf32>
      %cst_40 = arith.constant 0.000000e+00 : f32
      %114 = vector.broadcast %cst_40 : f32 to vector<8x1xf32>
      %115 = arith.select %113, %114, %101 : vector<8x1xi1>, vector<8x1xf32>
      %116 = arith.cmpf one, %112, %112 : vector<8x1xf32>
      %cst_41 = arith.constant 0.000000e+00 : f32
      %117 = vector.broadcast %cst_41 : f32 to vector<8x1xf32>
      %118 = arith.select %116, %117, %112 : vector<8x1xi1>, vector<8x1xf32>
      %119 = arith.mulf %115, %99 : vector<8x1xf32>
      %120 = arith.subf %96, %119 : vector<8x1xf32>
      %cst_42 = arith.constant 0.000000e+00 : f32
      %121 = vector.broadcast %cst_42 : f32 to vector<8x1xf32>
      %122 = arith.subf %121, %120 : vector<8x1xf32>
      %123 = arith.divf %122, %118 : vector<8x1xf32>
      %c0_43 = arith.constant 0 : index
      %c0_44 = arith.constant 0 : index
      %124 = vector.load %arg4[%c0_43, %c0_44] : memref<8x1xf32, #tpu.memory_space<vmem>>, vector<8x1xf32>
      tpu.vector_store %arg4[%c0_43, %c0_44], %123 {strides = array<i32>} : memref<8x1xf32, #tpu.memory_space<vmem>>, vector<8x1xf32>,
    } else {
    }
    return
  }
  func.func @transform_0(%arg0: i32, %arg1: i32) -> (i32, i32) {
    %c0_i32 = arith.constant 0 : i32
    return %arg0, %arg1 : i32, i32
  }
  func.func @transform_1(%arg0: i32, %arg1: i32) -> (i32, i32) {
    %c0_i32 = arith.constant 0 : i32
    return %arg0, %arg1 : i32, i32
  }
  func.func @transform_2(%arg0: i32, %arg1: i32) -> (i32, i32) {
    %c0_i32 = arith.constant 0 : i32
    %c0_i32_0 = arith.constant 0 : i32
    return %arg0, %c0_i32 : i32, i32
  }
}

</mosaic_0001>

<llo_original>
// kernel: tpu_custom_call.1
$region0: #{tpu_custom_call.1}
  #allocation0 [shape = 'u32[]', space=smem, size = 0x4, offset = 0x4, fixed_abs, tag = 'smem constant byte address 0x4 - core index']
  #allocation1 [shape = 'u32[144,128]{1,0:T(1,128)}', space=vmem, size = 0x12000, scoped, tag = 'internal scratch']
  #allocation2 [shape = 'f32[8,128]{1,0:T(8,128)}', space=vmem, size = 0x1000, scoped, tag = 'scratch operand']
  #allocation3 [shape = 'f32[8,128]{1,0:T(8,128)}', space=vmem, size = 0x1000, scoped, tag = 'scratch operand']
  #allocation4 [shape = 'f32[8,128]{1,0:T(8,128)}', space=vmem, size = 0x1000, scoped, tag = 'scratch operand']
  #allocation5 [shape = 'f32[8,128]{1,0:T(8,128)}', space=vmem, size = 0x1000, scoped, tag = 'scratch operand']
  %s0 = inlined_call_operand.hbm [shape: f32[2,1024], index: 0, kind: input, shape index: {}]
  %s1 = inlined_call_operand.hbm [shape: f32[2,1024], index: 1, kind: input, shape index: {}]
  %s2 = inlined_call_operand.vmem [shape: f32[2,1], index: 2, kind: output, shape index: {}]
  %s3 = sld [smem:[#allocation0]]
  $region64: #{tpu_custom_call.1} parent=0
    _
  %s5 = ssub.s32 1, %s3
  %s6 = scalar_select 0, %s5, %s3
  $region1: #{tpu_custom_call.1} parent=0
    #allocation6 [shape = 'u8[32768]{0}', space=vmem, size = 0x8000, scoped, tag = 'input window, operand 0, single buffered']
    #allocation7 [shape = 's32[1]{0}', space=sflag, size = 0x4, scoped, tag = 'scoped memory for tpu_custom_call.1']
    #allocation8 [shape = 'u8[32768]{0}', space=vmem, size = 0x8000, scoped, tag = 'input window, operand 1, single buffered']
    #allocation9 [shape = 's32[1]{0}', space=sflag, size = 0x4, scoped, tag = 'scoped memory for tpu_custom_call.1']
    #allocation10 [shape = 'u8[4096]{0}', space=vmem, size = 0x1000, scoped, tag = 'output window, operand 0, single buffered']
    %7 = vsyncpa [#allocation7], 0
    %8 = vsyncpa [#allocation9], 0
    // Predicated region
    $region2: #{tpu_custom_call.1} parent=1 // pred_check
      _
    $region3: #{tpu_custom_call.1} parent=1 // pred_check_branch
      %10 = sbr.rel (0) target = $region5
    $region4: #{tpu_custom_call.1} parent=1 // pred_region
      %s12 = ssub.s32 1024, 256
      %13 = vsyncadd [#allocation7], %s12
      %s14 = sshll.u32 [#allocation6], 4
      %s15 = int_to_ptr.vmem [resolvable:$true] %s14
      %20 = dma.hbm_to_vmem [thread:$0]  %s0, 256, %s15, [#allocation7], 256, 256, 16
    $region5: #{tpu_custom_call.1} parent=1 // pred_fallthru
      _
    // Predicated region
    $region6: #{tpu_custom_call.1} parent=1 // pred_check
      _
    $region7: #{tpu_custom_call.1} parent=1 // pred_check_branch
      %22 = sbr.rel (0) target = $region9
    $region8: #{tpu_custom_call.1} parent=1 // pred_region
      %s24 = ssub.s32 1024, 256
      %25 = vsyncadd [#allocation9], %s24
      %s26 = sshll.u32 [#allocation8], 4
      %s27 = int_to_ptr.vmem [resolvable:$true] %s26
      %32 = dma.hbm_to_vmem [thread:$0]  %s1, 256, %s27, [#allocation9], 256, 256, 16
    $region9: #{tpu_custom_call.1} parent=1 // pred_fallthru
      _
    // Predicated region
    $region10: #{tpu_custom_call.1} parent=1 // pred_check
      _
    $region11: #{tpu_custom_call.1} parent=1 // pred_check_branch
      %34 = sbr.rel (0) target = $region13
    $region12: #{tpu_custom_call.1} parent=1 // pred_region
      %35 = dma.done [#allocation7], 1024
    $region13: #{tpu_custom_call.1} parent=1 // pred_fallthru
      _
    // Predicated region
    $region14: #{tpu_custom_call.1} parent=1 // pred_check
      _
    $region15: #{tpu_custom_call.1} parent=1 // pred_check_branch
      %37 = sbr.rel (0) target = $region17
    $region16: #{tpu_custom_call.1} parent=1 // pred_region
      %38 = dma.done [#allocation9], 1024
    $region17: #{tpu_custom_call.1} parent=1 // pred_fallthru
      _
    %p39 = scmp.eq.s32.totalorder 0, 0
    // Predicated region
    $region18: #{tpu_custom_call.1} parent=1 // pred_check
      %p40 = pneg %p39
    $region19: #{tpu_custom_call.1} parent=1 // pred_check_branch
      %42 = sbr.rel (%p40) target = $region21
    $region20: #{tpu_custom_call.1} parent=1 // pred_region
      %43 = vst [vmem:[#allocation2] sm:$0xff] 0.0
      %44 = vst [vmem:[#allocation3] sm:$0xff] 0.0
      %45 = vst [vmem:[#allocation4] sm:$0xff] 0.0
      %46 = vst [vmem:[#allocation5] sm:$0xff] 0.0
    $region21: #{tpu_custom_call.1} parent=1 // pred_fallthru
      _
    %v47 = vld [vmem:[#allocation6] sm:$0xff]
    %v48 = vld [vmem:[#allocation6 + $0x8] sm:$0xff]
    %v49 = vld [vmem:[#allocation6 + $0x10] sm:$0xff]
    %v50 = vld [vmem:[#allocation6 + $0x18] sm:$0xff]
    %v51 = vld [vmem:[#allocation6 + $0x20] sm:$0xff]
    %v52 = vld [vmem:[#allocation6 + $0x28] sm:$0xff]
    %v53 = vld [vmem:[#allocation6 + $0x30] sm:$0xff]
    %v54 = vld [vmem:[#allocation6 + $0x38] sm:$0xff]
    %v55 = vld [vmem:[#allocation8] sm:$0xff]
    %v56 = vld [vmem:[#allocation8 + $0x8] sm:$0xff]
    %v57 = vld [vmem:[#allocation8 + $0x10] sm:$0xff]
    %v58 = vld [vmem:[#allocation8 + $0x18] sm:$0xff]
    %v59 = vld [vmem:[#allocation8 + $0x20] sm:$0xff]
    %v60 = vld [vmem:[#allocation8 + $0x28] sm:$0xff]
    %v61 = vld [vmem:[#allocation8 + $0x30] sm:$0xff]
    %v62 = vld [vmem:[#allocation8 + $0x38] sm:$0xff]
    %vm63 = vcmp.ne.f32.partialorder %v47, %v47
    %vm64 = vcmp.ne.f32.partialorder %v48, %v48
    %vm65 = vcmp.ne.f32.partialorder %v49, %v49
    %vm66 = vcmp.ne.f32.partialorder %v50, %v50
    %vm67 = vcmp.ne.f32.partialorder %v51, %v51
    %vm68 = vcmp.ne.f32.partialorder %v52, %v52
    %vm69 = vcmp.ne.f32.partialorder %v53, %v53
    %vm70 = vcmp.ne.f32.partialorder %v54, %v54
    %v71 = vsel %vm63, 0.0, %v47
    %v72 = vsel %vm64, 0.0, %v48
    %v73 = vsel %vm65, 0.0, %v49
    %v74 = vsel %vm66, 0.0, %v50
    %v75 = vsel %vm67, 0.0, %v51
    %v76 = vsel %vm68, 0.0, %v52
    %v77 = vsel %vm69, 0.0, %v53
    %v78 = vsel %vm70, 0.0, %v54
    %vm79 = vcmp.ne.f32.partialorder %v55, %v55
    %vm80 = vcmp.ne.f32.partialorder %v56, %v56
    %vm81 = vcmp.ne.f32.partialorder %v57, %v57
    %vm82 = vcmp.ne.f32.partialorder %v58, %v58
    %vm83 = vcmp.ne.f32.partialorder %v59, %v59
    %vm84 = vcmp.ne.f32.partialorder %v60, %v60
    %vm85 = vcmp.ne.f32.partialorder %v61, %v61
    %vm86 = vcmp.ne.f32.partialorder %v62, %v62
    %v87 = vsel %vm79, 0.0, %v55
    %v88 = vsel %vm80, 0.0, %v56
    %v89 = vsel %vm81, 0.0, %v57
    %v90 = vsel %vm82, 0.0, %v58
    %v91 = vsel %vm83, 0.0, %v59
    %v92 = vsel %vm84, 0.0, %v60
    %v93 = vsel %vm85, 0.0, %v61
    %v94 = vsel %vm86, 0.0, %v62
    %v95 = vld [vmem:[#allocation2] sm:$0xff]
    %v100 = vrot.slane %v47, 2
    %v101 = vrot.slane %v49, 2
    %v102 = vrot.slane %v51, 2
    %v103 = vrot.slane %v53, 2
    %v108 = vadd.f32 %v47, %v100
    %v109 = vadd.f32 %v49, %v101
    %v110 = vadd.f32 %v51, %v102
    %v111 = vadd.f32 %v53, %v103
    %v112 = vrot.slane %v47, 4
    %v113 = vrot.slane %v49, 4
    %v114 = vrot.slane %v51, 4
    %v115 = vrot.slane %v53, 4
    %v120 = vadd.f32 %v108, %v112
    %v121 = vadd.f32 %v109, %v113
    %v122 = vadd.f32 %v110, %v114
    %v123 = vadd.f32 %v111, %v115
    %v124 = vrot.slane %v47, 6
    %v125 = vrot.slane %v49, 6
    %v126 = vrot.slane %v51, 6
    %v127 = vrot.slane %v53, 6
    %v132 = vadd.f32 %v120, %v124
    %v133 = vadd.f32 %v121, %v125
    %v134 = vadd.f32 %v122, %v126
    %v135 = vadd.f32 %v123, %v127
    %v136 = vadd.f32 %v132, %v48
    %v137 = vadd.f32 %v133, %v50
    %v138 = vadd.f32 %v134, %v52
    %v139 = vadd.f32 %v135, %v54
    %v144 = vrot.slane %v48, 2
    %v145 = vrot.slane %v50, 2
    %v146 = vrot.slane %v52, 2
    %v147 = vrot.slane %v54, 2
    %v152 = vadd.f32 %v136, %v144
    %v153 = vadd.f32 %v137, %v145
    %v154 = vadd.f32 %v138, %v146
    %v155 = vadd.f32 %v139, %v147
    %v156 = vrot.slane %v48, 4
    %v157 = vrot.slane %v50, 4
    %v158 = vrot.slane %v52, 4
    %v159 = vrot.slane %v54, 4
    %v164 = vadd.f32 %v152, %v156
    %v165 = vadd.f32 %v153, %v157
    %v166 = vadd.f32 %v154, %v158
    %v167 = vadd.f32 %v155, %v159
    %v168 = vrot.slane %v48, 6
    %v169 = vrot.slane %v50, 6
    %v170 = vrot.slane %v52, 6
    %v171 = vrot.slane %v54, 6
    %v176 = vadd.f32 %v164, %v168
    %v177 = vadd.f32 %v165, %v169
    %v178 = vadd.f32 %v166, %v170
    %v179 = vadd.f32 %v167, %v171
    %v184 = vcombine.low %v176, %v177
    %v185 = vcombine.low %v178, %v179
    %v187 = vunpack.c.l.s4 1983009808
    %v188 = vunpack.c.0.s8 %v187
    %v189 = vlaneseq
    %v190 = vshrl.u32 %v189, 7
    %v191 = vsub.s32 %v188, %v190
    %v192 = vrot.slane %v184, %v191
    %v194 = vunpack.c.l.s4 1983009808
    %v195 = vunpack.c.0.s8 %v194
    %v196 = vlaneseq
    %v197 = vshrl.u32 %v196, 7
    %v198 = vsub.s32 %v195, %v197
    %v199 = vrot.slane %v185, %v198
    %v200 = vcombine.low %v192, %v199
    %v202 = vadd.f32 %v95, %v200
    %203 = vst [vmem:[#allocation2] sm:$0xff] %v202
    %v204 = vld [vmem:[#allocation3] sm:$0xff]
    %v205 = vmul.f32 %v47, %v47
    %v206 = vmul.f32 %v48, %v48
    %v207 = vmul.f32 %v49, %v49
    %v208 = vmul.f32 %v50, %v50
    %v209 = vmul.f32 %v51, %v51
    %v210 = vmul.f32 %v52, %v52
    %v211 = vmul.f32 %v53, %v53
    %v212 = vmul.f32 %v54, %v54
    %v217 = vrot.slane %v205, 2
    %v218 = vrot.slane %v207, 2
    %v219 = vrot.slane %v209, 2
    %v220 = vrot.slane %v211, 2
    %v225 = vadd.f32 %v205, %v217
    %v226 = vadd.f32 %v207, %v218
    %v227 = vadd.f32 %v209, %v219
    %v228 = vadd.f32 %v211, %v220
    %v229 = vrot.slane %v205, 4
    %v230 = vrot.slane %v207, 4
    %v231 = vrot.slane %v209, 4
    %v232 = vrot.slane %v211, 4
    %v237 = vadd.f32 %v225, %v229
    %v238 = vadd.f32 %v226, %v230
    %v239 = vadd.f32 %v227, %v231
    %v240 = vadd.f32 %v228, %v232
    %v241 = vrot.slane %v205, 6
    %v242 = vrot.slane %v207, 6
    %v243 = vrot.slane %v209, 6
    %v244 = vrot.slane %v211, 6
    %v249 = vadd.f32 %v237, %v241
    %v250 = vadd.f32 %v238, %v242
    %v251 = vadd.f32 %v239, %v243
    %v252 = vadd.f32 %v240, %v244
    %v253 = vadd.f32 %v249, %v206
    %v254 = vadd.f32 %v250, %v208
    %v255 = vadd.f32 %v251, %v210
    %v256 = vadd.f32 %v252, %v212
    %v261 = vrot.slane %v206, 2
    %v262 = vrot.slane %v208, 2
    %v263 = vrot.slane %v210, 2
    %v264 = vrot.slane %v212, 2
    %v269 = vadd.f32 %v253, %v261
    %v270 = vadd.f32 %v254, %v262
    %v271 = vadd.f32 %v255, %v263
    %v272 = vadd.f32 %v256, %v264
    %v273 = vrot.slane %v206, 4
    %v274 = vrot.slane %v208, 4
    %v275 = vrot.slane %v210, 4
    %v276 = vrot.slane %v212, 4
    %v281 = vadd.f32 %v269, %v273
    %v282 = vadd.f32 %v270, %v274
    %v283 = vadd.f32 %v271, %v275
    %v284 = vadd.f32 %v272, %v276
    %v285 = vrot.slane %v206, 6
    %v286 = vrot.slane %v208, 6
    %v287 = vrot.slane %v210, 6
    %v288 = vrot.slane %v212, 6
    %v293 = vadd.f32 %v281, %v285
    %v294 = vadd.f32 %v282, %v286
    %v295 = vadd.f32 %v283, %v287
    %v296 = vadd.f32 %v284, %v288
    %v301 = vcombine.low %v293, %v294
    %v302 = vcombine.low %v295, %v296
    %v304 = vunpack.c.l.s4 1983009808
    %v305 = vunpack.c.0.s8 %v304
    %v306 = vlaneseq
    %v307 = vshrl.u32 %v306, 7
    %v308 = vsub.s32 %v305, %v307
    %v309 = vrot.slane %v301, %v308
    %v311 = vunpack.c.l.s4 1983009808
    %v312 = vunpack.c.0.s8 %v311
    %v313 = vlaneseq
    %v314 = vshrl.u32 %v313, 7
    %v315 = vsub.s32 %v312, %v314
    %v316 = vrot.slane %v302, %v315
    %v317 = vcombine.low %v309, %v316
    %v319 = vadd.f32 %v204, %v317
    %320 = vst [vmem:[#allocation3] sm:$0xff] %v319
    %v321 = vld [vmem:[#allocation4] sm:$0xff]
    %v322 = vmul.f32 %v71, %v87
    %v323 = vmul.f32 %v72, %v88
    %v324 = vmul.f32 %v73, %v89
    %v325 = vmul.f32 %v74, %v90
    %v326 = vmul.f32 %v75, %v91
    %v327 = vmul.f32 %v76, %v92
    %v328 = vmul.f32 %v77, %v93
    %v329 = vmul.f32 %v78, %v94
    %v334 = vrot.slane %v322, 2
    %v335 = vrot.slane %v324, 2
    %v336 = vrot.slane %v326, 2
    %v337 = vrot.slane %v328, 2
    %v342 = vadd.f32 %v322, %v334
    %v343 = vadd.f32 %v324, %v335
    %v344 = vadd.f32 %v326, %v336
    %v345 = vadd.f32 %v328, %v337
    %v346 = vrot.slane %v322, 4
    %v347 = vrot.slane %v324, 4
    %v348 = vrot.slane %v326, 4
    %v349 = vrot.slane %v328, 4
    %v354 = vadd.f32 %v342, %v346
    %v355 = vadd.f32 %v343, %v347
    %v356 = vadd.f32 %v344, %v348
    %v357 = vadd.f32 %v345, %v349
    %v358 = vrot.slane %v322, 6
    %v359 = vrot.slane %v324, 6
    %v360 = vrot.slane %v326, 6
    %v361 = vrot.slane %v328, 6
    %v366 = vadd.f32 %v354, %v358
    %v367 = vadd.f32 %v355, %v359
    %v368 = vadd.f32 %v356, %v360
    %v369 = vadd.f32 %v357, %v361
    %v370 = vadd.f32 %v366, %v323
    %v371 = vadd.f32 %v367, %v325
    %v372 = vadd.f32 %v368, %v327
    %v373 = vadd.f32 %v369, %v329
    %v378 = vrot.slane %v323, 2
    %v379 = vrot.slane %v325, 2
    %v380 = vrot.slane %v327, 2
    %v381 = vrot.slane %v329, 2
    %v386 = vadd.f32 %v370, %v378
    %v387 = vadd.f32 %v371, %v379
    %v388 = vadd.f32 %v372, %v380
    %v389 = vadd.f32 %v373, %v381
    %v390 = vrot.slane %v323, 4
    %v391 = vrot.slane %v325, 4
    %v392 = vrot.slane %v327, 4
    %v393 = vrot.slane %v329, 4
    %v398 = vadd.f32 %v386, %v390
    %v399 = vadd.f32 %v387, %v391
    %v400 = vadd.f32 %v388, %v392
    %v401 = vadd.f32 %v389, %v393
    %v402 = vrot.slane %v323, 6
    %v403 = vrot.slane %v325, 6
    %v404 = vrot.slane %v327, 6
    %v405 = vrot.slane %v329, 6
    %v410 = vadd.f32 %v398, %v402
    %v411 = vadd.f32 %v399, %v403
    %v412 = vadd.f32 %v400, %v404
    %v413 = vadd.f32 %v401, %v405
    %v418 = vcombine.low %v410, %v411
    %v419 = vcombine.low %v412, %v413
    %v421 = vunpack.c.l.s4 1983009808
    %v422 = vunpack.c.0.s8 %v421
    %v423 = vlaneseq
    %v424 = vshrl.u32 %v423, 7
    %v425 = vsub.s32 %v422, %v424
    %v426 = vrot.slane %v418, %v425
    %v428 = vunpack.c.l.s4 1983009808
    %v429 = vunpack.c.0.s8 %v428
    %v430 = vlaneseq
    %v431 = vshrl.u32 %v430, 7
    %v432 = vsub.s32 %v429, %v431
    %v433 = vrot.slane %v419, %v432
    %v434 = vcombine.low %v426, %v433
    %v436 = vadd.f32 %v321, %v434
    %437 = vst [vmem:[#allocation4] sm:$0xff] %v436
    %v438 = vld [vmem:[#allocation5] sm:$0xff]
    %v443 = vrot.slane %v87, 2
    %v444 = vrot.slane %v89, 2
    %v445 = vrot.slane %v91, 2
    %v446 = vrot.slane %v93, 2
    %v451 = vadd.f32 %v87, %v443
    %v452 = vadd.f32 %v89, %v444
    %v453 = vadd.f32 %v91, %v445
    %v454 = vadd.f32 %v93, %v446
    %v455 = vrot.slane %v87, 4
    %v456 = vrot.slane %v89, 4
    %v457 = vrot.slane %v91, 4
    %v458 = vrot.slane %v93, 4
    %v463 = vadd.f32 %v451, %v455
    %v464 = vadd.f32 %v452, %v456
    %v465 = vadd.f32 %v453, %v457
    %v466 = vadd.f32 %v454, %v458
    %v467 = vrot.slane %v87, 6
    %v468 = vrot.slane %v89, 6
    %v469 = vrot.slane %v91, 6
    %v470 = vrot.slane %v93, 6
    %v475 = vadd.f32 %v463, %v467
    %v476 = vadd.f32 %v464, %v468
    %v477 = vadd.f32 %v465, %v469
    %v478 = vadd.f32 %v466, %v470
    %v479 = vadd.f32 %v475, %v88
    %v480 = vadd.f32 %v476, %v90
    %v481 = vadd.f32 %v477, %v92
    %v482 = vadd.f32 %v478, %v94
    %v487 = vrot.slane %v88, 2
    %v488 = vrot.slane %v90, 2
    %v489 = vrot.slane %v92, 2
    %v490 = vrot.slane %v94, 2
    %v495 = vadd.f32 %v479, %v487
    %v496 = vadd.f32 %v480, %v488
    %v497 = vadd.f32 %v481, %v489
    %v498 = vadd.f32 %v482, %v490
    %v499 = vrot.slane %v88, 4
    %v500 = vrot.slane %v90, 4
    %v501 = vrot.slane %v92, 4
    %v502 = vrot.slane %v94, 4
    %v507 = vadd.f32 %v495, %v499
    %v508 = vadd.f32 %v496, %v500
    %v509 = vadd.f32 %v497, %v501
    %v510 = vadd.f32 %v498, %v502
    %v511 = vrot.slane %v88, 6
    %v512 = vrot.slane %v90, 6
    %v513 = vrot.slane %v92, 6
    %v514 = vrot.slane %v94, 6
    %v519 = vadd.f32 %v507, %v511
    %v520 = vadd.f32 %v508, %v512
    %v521 = vadd.f32 %v509, %v513
    %v522 = vadd.f32 %v510, %v514
    %v527 = vcombine.low %v519, %v520
    %v528 = vcombine.low %v521, %v522
    %v530 = vunpack.c.l.s4 1983009808
    %v531 = vunpack.c.0.s8 %v530
    %v532 = vlaneseq
    %v533 = vshrl.u32 %v532, 7
    %v534 = vsub.s32 %v531, %v533
    %v535 = vrot.slane %v527, %v534
    %v537 = vunpack.c.l.s4 1983009808
    %v538 = vunpack.c.0.s8 %v537
    %v539 = vlaneseq
    %v540 = vshrl.u32 %v539, 7
    %v541 = vsub.s32 %v538, %v540
    %v542 = vrot.slane %v528, %v541
    %v543 = vcombine.low %v535, %v542
    %v545 = vadd.f32 %v438, %v543
    %546 = vst [vmem:[#allocation5] sm:$0xff] %v545
    // Predicated region
    $region22: #{tpu_custom_call.1} parent=1 // pred_check
      %p547 = pneg %p39
    $region23: #{tpu_custom_call.1} parent=1 // pred_check_branch
      %549 = sbr.rel (%p547) target = $region25
    $region24: #{tpu_custom_call.1} parent=1 // pred_region
      %v550 = vld [vmem:[#allocation2] sm:$0xff]
      %551 = vadd.xlane.f32.xlu0 %v550
      %v552 = vpop.xlane.xlu0 %551
      %v553 = vld [vmem:[#allocation3] sm:$0xff]
      %554 = vadd.xlane.f32.xlu0 %v553
      %v555 = vpop.xlane.xlu0 %554
      %v556 = vld [vmem:[#allocation4] sm:$0xff]
      %557 = vadd.xlane.f32.xlu0 %v556
      %v558 = vpop.xlane.xlu0 %557
      %v559 = vld [vmem:[#allocation5] sm:$0xff]
      %560 = vadd.xlane.f32.xlu0 %v559
      %v561 = vpop.xlane.xlu0 %560
      %v562 = vrcp.pop 1024.0
      %v563 = vmul.f32 %v552, %v562
      %v564 = vmul.f32 %v563, 1024.0
      %v565 = vmul.f32 %v564, %v563
      %v566 = vsub.f32 %v555, %v565
      %v567 = vrcp.pop 1023.0
      %v568 = vmul.f32 %v566, %v567
      %v569 = vmax.f32 %v568, 0.0
      %v570 = vrsqrt.pop %v569
      %v571 = vmul.f32 %v569, %v570
      %vm572 = vcmp.eq.f32.partialorder %v569, inf
      %v573 = vsel %vm572, %v569, %v571
      %vm574 = vcmp.eq.f32.partialorder %v569, 0.0
      %v575 = vand.u32 %v569, 2147483648
      %v576 = vsel %vm574, %v575, %v573
      %v577 = vadd.f32 %v576, 1e-08
      %vm578 = vcmp.ne.f32.partialorder %v563, %v563
      %v579 = vsel %vm578, 0.0, %v563
      %vm580 = vcmp.ne.f32.partialorder %v577, %v577
      %v581 = vsel %vm580, 0.0, %v577
      %v582 = vmul.f32 %v579, %v561
      %v583 = vsub.f32 %v558, %v582
      %v584 = vsub.f32 0.0, %v583
      %v585 = vrcp.pop %v581
      %v586 = vmul.f32 %v584, %v585
      %vm587 = vcmask 7168
      %588 = vst.msk [vmem:[#allocation10] sm:$0xff] %vm587, %v586
    $region25: #{tpu_custom_call.1} parent=1 // pred_fallthru
      _
    // Predicated region
    $region26: #{tpu_custom_call.1} parent=1 // pred_check
      _
    $region27: #{tpu_custom_call.1} parent=1 // pred_check_branch
      %590 = sbr.rel (0) target = $region29
    $region28: #{tpu_custom_call.1} parent=1 // pred_region
      // Predicated region
      $region30: #{tpu_custom_call.1} parent=28 // pred_check
        _
      $region31: #{tpu_custom_call.1} parent=28 // pred_check_branch
        %592 = sbr.rel (0) target = $region33
      $region32: #{tpu_custom_call.1} parent=28 // pred_region
        // Predicated region
        $region34: #{tpu_custom_call.1} parent=32 // pred_check
          _
        $region35: #{tpu_custom_call.1} parent=32 // pred_check_branch
          %594 = sbr.rel target = $region37
        $region36: #{tpu_custom_call.1} parent=32 // pred_region
          // Predicated region
          $region49: #{tpu_custom_call.1} parent=36 // pred_check
            _
          $region50: #{tpu_custom_call.1} parent=36 // pred_check_branch
            %609 = sbr.rel (0) target = $region52
          $region51: #{tpu_custom_call.1} parent=36 // pred_region
            loop: start=0, step=1, limit=1
            $region53: #{tpu_custom_call.1} parent=51 // loop_pre_header
              _
            $region54: #{tpu_custom_call.1} parent=51 // loop_header
              %s612 = sphi 0, %s616
              %p613 = scmp.ge.s32.totalorder %s612, 1
              %s617 = sphi [#allocation10], [#allocation10]
              %s618 = sphi %s2, %s2
            $region55: #{tpu_custom_call.1} parent=51 // loop_header_branch
              %615 = sbr.rel (%p613) target = $region59
            $region56: #{tpu_custom_call.1} parent=51 // loop_body
              %v619 = vld [vmem:[%s617] sm:$0x3]
              %620 = vst [vmem:[%s618] sm:$0x3] %v619
            $region57: #{tpu_custom_call.1} parent=51 // loop_footer
              %s616 = sadd.s32 1, %s612
            $region58: #{tpu_custom_call.1} parent=51 // loop_footer_branch
              %611 = sbr.rel target = $region54
            $region59: #{tpu_custom_call.1} parent=51 // loop_exit
              _
          $region52: #{tpu_custom_call.1} parent=36 // pred_fallthru
            _
        $region37: #{tpu_custom_call.1} parent=32 // pred_fallthru
          _
        // Predicated region
        $region38: #{tpu_custom_call.1} parent=32 // pred_check
          _
        $region39: #{tpu_custom_call.1} parent=32 // pred_check_branch
          %596 = sbr.rel (0) target = $region41
        $region40: #{tpu_custom_call.1} parent=32 // pred_region
          loop: start=0, step=1, limit=1
          $region42: #{tpu_custom_call.1} parent=40 // loop_pre_header
            _
          $region43: #{tpu_custom_call.1} parent=40 // loop_header
            %s599 = sphi 0, %s603
            %p600 = scmp.ge.s32.totalorder %s599, 1
            %s604 = sphi [#allocation10], [#allocation10]
            %s605 = sphi %s2, %s2
          $region44: #{tpu_custom_call.1} parent=40 // loop_header_branch
            %602 = sbr.rel (%p600) target = $region48
          $region45: #{tpu_custom_call.1} parent=40 // loop_body
            %v606 = vld [vmem:[%s604] sm:$0x3]
            %607 = vst [vmem:[%s605] sm:$0x3] %v606
          $region46: #{tpu_custom_call.1} parent=40 // loop_footer
            %s603 = sadd.s32 1, %s599
          $region47: #{tpu_custom_call.1} parent=40 // loop_footer_branch
            %598 = sbr.rel target = $region43
          $region48: #{tpu_custom_call.1} parent=40 // loop_exit
            _
        $region41: #{tpu_custom_call.1} parent=32 // pred_fallthru
          _
      $region33: #{tpu_custom_call.1} parent=28 // pred_fallthru
        _
      %621 = vnop
    $region29: #{tpu_custom_call.1} parent=1 // pred_fallthru
      _
    // Predicated region
    $region60: #{tpu_custom_call.1} parent=1 // pred_check
      _
    $region61: #{tpu_custom_call.1} parent=1 // pred_check_branch
      %623 = sbr.rel (0) target = $region63
    $region62: #{tpu_custom_call.1} parent=1 // pred_region
      _
    $region63: #{tpu_custom_call.1} parent=1 // pred_fallthru
      _
    %624 = vsyncpa [#allocation7], 1
    %625 = vsyncpa [#allocation9], 1

</llo_original>
